<compile_context>
chip_gen: v7x
topology: tpu7x:2x2x1
jax: 0.10.0
libtpu: 0.0.40
codegen_flags: <defaults>
</compile_context>

<pallas_src>
import functools
import math

import jax
import jax.numpy as jnp
from jax.experimental import pallas as pl
from jax.experimental.pallas import tpu as pltpu


def _attention_head_kernel(q_ref, k_ref, v_ref,
                           wq_ref, bq_ref,
                           wk_ref, bk_ref,
                           wv_ref, bv_ref,
                           o_ref,
                           q_scr, m_scr, l_scr, acc_scr,
                           *, compute_dtype):
    """Fused Linear q/k/v projections + flash-style attention.

    Grid = (batch_blocks, kv_blocks); the kv axis is the reduction axis
    ("arbitrary") with online-softmax state kept in VMEM scratch.
    """
    kv = pl.program_id(1)
    Bt, Sq, Dm = q_ref.shape
    Tk = k_ref.shape[1]
    Dp = acc_scr.shape[-1]

    @pl.when(kv == 0)
    def _init():
        # Q projection once per batch block (1/sqrt(d_k) pre-folded into
        # wq/bq by the wrapper).  Batch folded into M: (Bt*Sq, Dm) x (Dm, Dp).
        q2 = q_ref[...].reshape(Bt * Sq, Dm).astype(compute_dtype)
        Q = jnp.dot(q2, wq_ref[...], preferred_element_type=jnp.float32)
        Q = Q + bq_ref[...]
        q_scr[...] = Q.reshape(Bt, Sq, Dp).astype(compute_dtype)
        m_scr[...] = jnp.full_like(m_scr, -jnp.inf)
        l_scr[...] = jnp.zeros_like(l_scr)
        acc_scr[...] = jnp.zeros_like(acc_scr)

    # K/V projections for this KV tile only: (Bt*Tk, Dm) x (Dm, Dp) each.
    k2 = k_ref[...].reshape(Bt * Tk, Dm).astype(compute_dtype)
    v2 = v_ref[...].reshape(Bt * Tk, Dm).astype(compute_dtype)
    K = jnp.dot(k2, wk_ref[...], preferred_element_type=jnp.float32) + bk_ref[...]
    V = jnp.dot(v2, wv_ref[...], preferred_element_type=jnp.float32) + bv_ref[...]
    Kb = K.reshape(Bt, Tk, Dp).astype(compute_dtype)
    Vb = V.reshape(Bt, Tk, Dp).astype(compute_dtype)

    # Q K^T without materializing a transpose; f32 accumulation.
    logits = jnp.einsum("bqd,bkd->bqk", q_scr[...], Kb,
                        preferred_element_type=jnp.float32)

    # Online softmax — mathematically identical to the reference
    # exp / sum(exp) for mask=None.  Softmax math stays in f32.
    # TODO(synk): mask path (masked_fill(mask, 0) before exp) not implemented;
    # the module is only exercised with mask=None here.
    m_prev = m_scr[...]
    m_new = jnp.maximum(m_prev, jnp.max(logits, axis=-1, keepdims=True))
    alpha = jnp.exp(m_prev - m_new)
    p = jnp.exp(logits - m_new)
    l_scr[...] = alpha * l_scr[...] + jnp.sum(p, axis=-1, keepdims=True)
    acc_scr[...] = alpha * acc_scr[...] + jnp.einsum(
        "bqk,bkd->bqd", p.astype(compute_dtype), Vb,
        preferred_element_type=jnp.float32)
    m_scr[...] = m_new

    @pl.when(kv == pl.num_programs(1) - 1)
    def _finalize():
        # TODO(synk): nn.Dropout is identity in eval mode; not applied.
        out = acc_scr[...] * pl.reciprocal(l_scr[...], approx=True)
        # Drop the zero-padded feature lanes at the store: the output block is
        # Df-wide, avoiding an extra HBM slice pass in the wrapper.
        o_ref[...] = out[..., :o_ref.shape[-1]].astype(o_ref.dtype)


def attention_head(queries, keys, values, wq, bq, wk, bk, wv, bv,
                   *, block_b=None, block_kv=None,
                   compute_dtype=jnp.bfloat16, out_dtype=None,
                   lane=128, vmem_limit_bytes=48 * 1024 * 1024):
    B, Sq, Dm = queries.shape
    Sk = keys.shape[1]
    Df = wq.shape[-1]
    if out_dtype is None:
        out_dtype = queries.dtype

    scale = 1.0 / math.sqrt(Df)

    # Lane-dense feature dim for the MXU / attention matmuls: pad Df up to a
    # multiple of 128 with zeros (padded columns contribute exactly zero).
    Dp = max(lane, pl.cdiv(Df, lane) * lane)
    pad = Dp - Df

    def prep_w(w, fold_scale=False):
        w = w * scale if fold_scale else w
        if pad:
            w = jnp.pad(w, ((0, 0), (0, pad)))
        return w.astype(compute_dtype)      # pre-cast: no per-step VPU casts

    def prep_b(b, fold_scale=False):
        b = b * scale if fold_scale else b
        if pad:
            b = jnp.pad(b, ((0, 0), (0, pad)))
        return b.astype(jnp.float32)        # tiny; added to the f32 accumulator

    # 1/sqrt(d_k) folded into the Q projection (one-time, outside the grid).
    wq_p, bq_p = prep_w(wq, True), prep_b(bq, True)
    wk_p, bk_p = prep_w(wk), prep_b(bk)
    wv_p, bv_p = prep_w(wv), prep_b(bv)

    # Batch tiling: aim for several grid steps (>= 2 for v7x megacore
    # sharding) so q/k/v DMAs overlap the previous step's compute.  For real
    # shapes also tune block_b so block_b*Sq >= 256 (fills the 256-wide MXU on
    # v6e/v7x; 128-aligned suffices on v5e) and the per-step tile fits VMEM.
    if block_b is None:
        cap = max(1, pl.cdiv(B, 8))
        block_b = next(d for d in range(cap, 0, -1) if B % d == 0)
    assert B % block_b == 0, "block_b must divide B"

    # KV tiling (flash-style): bounds the logits intermediate to
    # (block_b, Sq, block_kv) so VMEM use no longer grows as Sk^2.
    if block_kv is None:
        cap = min(Sk, 512)
        block_kv = next((d for d in range(cap, 7, -1)
                         if Sk % d == 0 and d % 8 == 0), Sk)
    assert Sk % block_kv == 0, "block_kv must divide the key sequence length"

    grid = (B // block_b, Sk // block_kv)

    q_spec = pl.BlockSpec((block_b, Sq, Dm), lambda b, kv: (b, 0, 0))
    kv_spec = pl.BlockSpec((block_b, block_kv, Dm), lambda b, kv: (b, kv, 0))
    # Constant index_maps -> weights/biases are DMA'd once and stay resident.
    w_spec = pl.BlockSpec((Dm, Dp), lambda b, kv: (0, 0))
    b_spec = pl.BlockSpec((1, Dp), lambda b, kv: (0, 0))
    out_spec = pl.BlockSpec((block_b, Sq, Df), lambda b, kv: (b, 0, 0))

    kernel = functools.partial(_attention_head_kernel,
                               compute_dtype=compute_dtype)

    return pl.pallas_call(
        kernel,
        out_shape=jax.ShapeDtypeStruct((B, Sq, Df), out_dtype),
        grid_spec=pltpu.PrefetchScalarGridSpec(
            num_scalar_prefetch=0,
            grid=grid,
            in_specs=[q_spec, kv_spec, kv_spec,
                      w_spec, b_spec,
                      w_spec, b_spec,
                      w_spec, b_spec],
            out_specs=out_spec,
            scratch_shapes=[
                pltpu.VMEM((block_b, Sq, Dp), compute_dtype),  # projected Q
                pltpu.VMEM((block_b, Sq, 1), jnp.float32),     # running max
                pltpu.VMEM((block_b, Sq, 1), jnp.float32),     # running sum
                pltpu.VMEM((block_b, Sq, Dp), jnp.float32),    # output accum
            ]),
        compiler_params=pltpu.CompilerParams(
            dimension_semantics=("parallel", "arbitrary"),
            vmem_limit_bytes=vmem_limit_bytes),
    )(queries, keys, values, wq_p, bq_p, wk_p, bk_p, wv_p, bv_p)


def reference(queries, keys, values, wq, bq, wk, bk, wv, bv):
    Q = queries @ wq + bq
    K = keys @ wk + bk
    V = values @ wv + bv
    d_k = K.shape[-1]
    attn = jnp.einsum("bqd,bkd->bqk", Q, K) / math.sqrt(d_k)
    attn = jnp.exp(attn)
    attn = attn / attn.sum(-1, keepdims=True)
    return jnp.einsum("bqk,bkd->bqd", attn, V)


if __name__ == "__main__":
    B, S = 2, 8
    d_model, d_feature = 32, 16

    key = jax.random.PRNGKey(0)
    ks = jax.random.split(key, 9)

    queries = jax.random.normal(ks[0], (B, S, d_model), jnp.float32)
    keys_ = jax.random.normal(ks[1], (B, S, d_model), jnp.float32)
    values = jax.random.normal(ks[2], (B, S, d_model), jnp.float32)

    # Deterministic Linear params (uniform init like PyTorch, same bound).
    bound = 1.0 / math.sqrt(d_model)
    wq = jax.random.uniform(ks[3], (d_model, d_feature), jnp.float32, -bound, bound)
    bq = jax.random.uniform(ks[4], (1, d_feature), jnp.float32, -bound, bound)
    wk = jax.random.uniform(ks[5], (d_model, d_feature), jnp.float32, -bound, bound)
    bk = jax.random.uniform(ks[6], (1, d_feature), jnp.float32, -bound, bound)
    wv = jax.random.uniform(ks[7], (d_model, d_feature), jnp.float32, -bound, bound)
    bv = jax.random.uniform(ks[8], (1, d_feature), jnp.float32, -bound, bound)

    out = attention_head(queries, keys_, values, wq, bq, wk, bk, wv, bv)
    out = jax.block_until_ready(out)

    ref = reference(queries, keys_, values, wq, bq, wk, bk, wv, bv)
    assert out.shape == (B, S, d_feature)
    # bf16 matmul operands (f32 accumulate) + approx reciprocal -> loose tol.
    assert bool(jnp.all(jnp.isfinite(out)))
    assert jnp.allclose(out, ref, atol=3e-2, rtol=3e-2)

    print("KERNEL_OK")
</pallas_src>

<mosaic_0001>
module attributes {stable_mosaic.version = 11 : i64} {
  func.func @_attention_head_kernel(%arg0: i32, %arg1: i32, %arg2: memref<1x8x32xf32, #tpu.memory_space<vmem>>, %arg3: memref<1x8x32xf32, #tpu.memory_space<vmem>>, %arg4: memref<1x8x32xf32, #tpu.memory_space<vmem>>, %arg5: memref<32x128xbf16, #tpu.memory_space<vmem>>, %arg6: memref<1x128xf32, #tpu.memory_space<vmem>>, %arg7: memref<32x128xbf16, #tpu.memory_space<vmem>>, %arg8: memref<1x128xf32, #tpu.memory_space<vmem>>, %arg9: memref<32x128xbf16, #tpu.memory_space<vmem>>, %arg10: memref<1x128xf32, #tpu.memory_space<vmem>>, %arg11: memref<1x8x16xf32, #tpu.memory_space<vmem>>, %arg12: memref<1x8x128xbf16, #tpu.memory_space<vmem>>, %arg13: memref<1x8x1xf32, #tpu.memory_space<vmem>>, %arg14: memref<1x8x1xf32, #tpu.memory_space<vmem>>, %arg15: memref<1x8x128xf32, #tpu.memory_space<vmem>>) attributes {dimension_semantics = [#tpu.dimension_semantics<parallel>, #tpu.dimension_semantics<arbitrary>], iteration_bounds = array<i64: 2, 1>, scalar_prefetch = 0 : i64, scratch_operands = 4 : i64, tpu.core_type = #tpu.core_type<tc>, window_params = [{transform_indices = @transform_0, window_bounds = array<i64: 1, 8, 32>}, {transform_indices = @transform_1, window_bounds = array<i64: 1, 8, 32>}, {transform_indices = @transform_2, window_bounds = array<i64: 1, 8, 32>}, {pipeline_mode = #tpu.pipeline_mode<synchronous>, transform_indices = @transform_3, window_bounds = array<i64: 32, 128>}, {pipeline_mode = #tpu.pipeline_mode<synchronous>, transform_indices = @transform_4, window_bounds = array<i64: 1, 128>}, {pipeline_mode = #tpu.pipeline_mode<synchronous>, transform_indices = @transform_5, window_bounds = array<i64: 32, 128>}, {pipeline_mode = #tpu.pipeline_mode<synchronous>, transform_indices = @transform_6, window_bounds = array<i64: 1, 128>}, {pipeline_mode = #tpu.pipeline_mode<synchronous>, transform_indices = @transform_7, window_bounds = array<i64: 32, 128>}, {pipeline_mode = #tpu.pipeline_mode<synchronous>, transform_indices = @transform_8, window_bounds = array<i64: 1, 128>}, {transform_indices = @transform_9, window_bounds = array<i64: 1, 8, 16>}]} {
    %c0_i32 = arith.constant 0 : i32
    %0 = arith.cmpi eq, %arg1, %c0_i32 : i32
    %1 = arith.extui %0 : i1 to i32
    %c0_i32_0 = arith.constant 0 : i32
    %2 = arith.cmpi ne, %1, %c0_i32_0 : i32
    scf.if %2 {
      %c0_42 = arith.constant 0 : index
      %c0_43 = arith.constant 0 : index
      %c0_44 = arith.constant 0 : index
      %51 = vector.load %arg2[%c0_42, %c0_43, %c0_44] : memref<1x8x32xf32, #tpu.memory_space<vmem>>, vector<1x8x32xf32>
      %52 = vector.shape_cast %51 : vector<1x8x32xf32> to vector<8x32xf32>
      %53 = arith.truncf %52 : vector<8x32xf32> to vector<8x32xbf16>
      %c0_45 = arith.constant 0 : index
      %c0_46 = arith.constant 0 : index
      %54 = vector.load %arg5[%c0_45, %c0_46] : memref<32x128xbf16, #tpu.memory_space<vmem>>, vector<32x128xbf16>
      %cst_47 = arith.constant dense<0.000000e+00> : vector<8x128xf32>
      %55 = tpu.matmul %53, %54, %cst_47 {dimension_numbers = #tpu.dot_dimension_numbers<[1], [0], [0], [1], [0, 0, 1, 1], [], []>} : vector<8x32xbf16>, vector<32x128xbf16>, vector<8x128xf32> -> vector<8x128xf32>
      %c0_48 = arith.constant 0 : index
      %c0_49 = arith.constant 0 : index
      %56 = vector.load %arg6[%c0_48, %c0_49] : memref<1x128xf32, #tpu.memory_space<vmem>>, vector<1x128xf32>
      %57 = vector.broadcast %56 : vector<1x128xf32> to vector<8x128xf32>
      %58 = arith.addf %55, %57 : vector<8x128xf32>
      %59 = vector.shape_cast %58 : vector<8x128xf32> to vector<1x8x128xf32>
      %60 = arith.truncf %59 : vector<1x8x128xf32> to vector<1x8x128xbf16>
      %c0_50 = arith.constant 0 : index
      %c0_51 = arith.constant 0 : index
      %c0_52 = arith.constant 0 : index
      %61 = vector.load %arg12[%c0_50, %c0_51, %c0_52] : memref<1x8x128xbf16, #tpu.memory_space<vmem>>, vector<1x8x128xbf16>
      tpu.vector_store %arg12[%c0_50, %c0_51, %c0_52], %60 {strides = array<i32>} : memref<1x8x128xbf16, #tpu.memory_space<vmem>>, vector<1x8x128xbf16>,
      %cst_53 = arith.constant 0xFF800000 : f32
      %62 = vector.broadcast %cst_53 : f32 to vector<1x8x1xf32>
      %c0_54 = arith.constant 0 : index
      %c0_55 = arith.constant 0 : index
      %c0_56 = arith.constant 0 : index
      %63 = vector.load %arg13[%c0_54, %c0_55, %c0_56] : memref<1x8x1xf32, #tpu.memory_space<vmem>>, vector<1x8x1xf32>
      tpu.vector_store %arg13[%c0_54, %c0_55, %c0_56], %62 {strides = array<i32>} : memref<1x8x1xf32, #tpu.memory_space<vmem>>, vector<1x8x1xf32>,
      %cst_57 = arith.constant 0.000000e+00 : f32
      %64 = vector.broadcast %cst_57 : f32 to vector<1x8x1xf32>
      %c0_58 = arith.constant 0 : index
      %c0_59 = arith.constant 0 : index
      %c0_60 = arith.constant 0 : index
      %65 = vector.load %arg14[%c0_58, %c0_59, %c0_60] : memref<1x8x1xf32, #tpu.memory_space<vmem>>, vector<1x8x1xf32>
      tpu.vector_store %arg14[%c0_58, %c0_59, %c0_60], %64 {strides = array<i32>} : memref<1x8x1xf32, #tpu.memory_space<vmem>>, vector<1x8x1xf32>,
      %cst_61 = arith.constant 0.000000e+00 : f32
      %66 = vector.broadcast %cst_61 : f32 to vector<1x8x128xf32>
      %c0_62 = arith.constant 0 : index
      %c0_63 = arith.constant 0 : index
      %c0_64 = arith.constant 0 : index
      %67 = vector.load %arg15[%c0_62, %c0_63, %c0_64] : memref<1x8x128xf32, #tpu.memory_space<vmem>>, vector<1x8x128xf32>
      tpu.vector_store %arg15[%c0_62, %c0_63, %c0_64], %66 {strides = array<i32>} : memref<1x8x128xf32, #tpu.memory_space<vmem>>, vector<1x8x128xf32>,
    } else {
    }
    %c0 = arith.constant 0 : index
    %c0_1 = arith.constant 0 : index
    %c0_2 = arith.constant 0 : index
    %3 = vector.load %arg3[%c0, %c0_1, %c0_2] : memref<1x8x32xf32, #tpu.memory_space<vmem>>, vector<1x8x32xf32>
    %4 = vector.shape_cast %3 : vector<1x8x32xf32> to vector<8x32xf32>
    %5 = arith.truncf %4 : vector<8x32xf32> to vector<8x32xbf16>
    %c0_3 = arith.constant 0 : index
    %c0_4 = arith.constant 0 : index
    %c0_5 = arith.constant 0 : index
    %6 = vector.load %arg4[%c0_3, %c0_4, %c0_5] : memref<1x8x32xf32, #tpu.memory_space<vmem>>, vector<1x8x32xf32>
    %7 = vector.shape_cast %6 : vector<1x8x32xf32> to vector<8x32xf32>
    %8 = arith.truncf %7 : vector<8x32xf32> to vector<8x32xbf16>
    %c0_6 = arith.constant 0 : index
    %c0_7 = arith.constant 0 : index
    %9 = vector.load %arg7[%c0_6, %c0_7] : memref<32x128xbf16, #tpu.memory_space<vmem>>, vector<32x128xbf16>
    %cst = arith.constant dense<0.000000e+00> : vector<8x128xf32>
    %10 = tpu.matmul %5, %9, %cst {dimension_numbers = #tpu.dot_dimension_numbers<[1], [0], [0], [1], [0, 0, 1, 1], [], []>} : vector<8x32xbf16>, vector<32x128xbf16>, vector<8x128xf32> -> vector<8x128xf32>
    %c0_8 = arith.constant 0 : index
    %c0_9 = arith.constant 0 : index
    %11 = vector.load %arg8[%c0_8, %c0_9] : memref<1x128xf32, #tpu.memory_space<vmem>>, vector<1x128xf32>
    %12 = vector.broadcast %11 : vector<1x128xf32> to vector<8x128xf32>
    %13 = arith.addf %10, %12 : vector<8x128xf32>
    %c0_10 = arith.constant 0 : index
    %c0_11 = arith.constant 0 : index
    %14 = vector.load %arg9[%c0_10, %c0_11] : memref<32x128xbf16, #tpu.memory_space<vmem>>, vector<32x128xbf16>
    %cst_12 = arith.constant dense<0.000000e+00> : vector<8x128xf32>
    %15 = tpu.matmul %8, %14, %cst_12 {dimension_numbers = #tpu.dot_dimension_numbers<[1], [0], [0], [1], [0, 0, 1, 1], [], []>} : vector<8x32xbf16>, vector<32x128xbf16>, vector<8x128xf32> -> vector<8x128xf32>
    %c0_13 = arith.constant 0 : index
    %c0_14 = arith.constant 0 : index
    %16 = vector.load %arg10[%c0_13, %c0_14] : memref<1x128xf32, #tpu.memory_space<vmem>>, vector<1x128xf32>
    %17 = vector.broadcast %16 : vector<1x128xf32> to vector<8x128xf32>
    %18 = arith.addf %15, %17 : vector<8x128xf32>
    %19 = vector.shape_cast %13 : vector<8x128xf32> to vector<1x8x128xf32>
    %20 = arith.truncf %19 : vector<1x8x128xf32> to vector<1x8x128xbf16>
    %21 = vector.shape_cast %18 : vector<8x128xf32> to vector<1x8x128xf32>
    %22 = arith.truncf %21 : vector<1x8x128xf32> to vector<1x8x128xbf16>
    %c0_15 = arith.constant 0 : index
    %c0_16 = arith.constant 0 : index
    %c0_17 = arith.constant 0 : index
    %23 = vector.load %arg12[%c0_15, %c0_16, %c0_17] : memref<1x8x128xbf16, #tpu.memory_space<vmem>>, vector<1x8x128xbf16>
    "tpu.trace_start"() <{level = 10 : i32, message = "bqd,bkd->bqk"}> : () -> ()
    %cst_18 = arith.constant dense<0.000000e+00> : vector<1x8x8xf32>
    %24 = tpu.matmul %23, %20, %cst_18 {dimension_numbers = #tpu.dot_dimension_numbers<[2], [2], [1], [1], [0, 0, 0, 1, 1, 1], [0], [0]>} : vector<1x8x128xbf16>, vector<1x8x128xbf16>, vector<1x8x8xf32> -> vector<1x8x8xf32>
    "tpu.trace_stop"() : () -> ()
    %c0_19 = arith.constant 0 : index
    %c0_20 = arith.constant 0 : index
    %c0_21 = arith.constant 0 : index
    %25 = vector.load %arg13[%c0_19, %c0_20, %c0_21] : memref<1x8x1xf32, #tpu.memory_space<vmem>>, vector<1x8x1xf32>
    %cst_22 = arith.constant dense<0xFF800000> : vector<1x8xf32>
    %26 = vector.multi_reduction <maximumf>, %24, %cst_22 [2] : vector<1x8x8xf32> to vector<1x8xf32>
    %27 = vector.shape_cast %26 : vector<1x8xf32> to vector<1x8x1xf32>
    %28 = arith.maximumf %25, %27 : vector<1x8x1xf32>
    %29 = arith.subf %25, %28 : vector<1x8x1xf32>
    %30 = math.exp %29 : vector<1x8x1xf32>
    %31 = vector.broadcast %28 : vector<1x8x1xf32> to vector<1x8x8xf32>
    %32 = arith.subf %24, %31 : vector<1x8x8xf32>
    %33 = math.exp %32 : vector<1x8x8xf32>
    %c0_23 = arith.constant 0 : index
    %c0_24 = arith.constant 0 : index
    %c0_25 = arith.constant 0 : index
    %34 = vector.load %arg14[%c0_23, %c0_24, %c0_25] : memref<1x8x1xf32, #tpu.memory_space<vmem>>, vector<1x8x1xf32>
    %35 = arith.mulf %30, %34 : vector<1x8x1xf32>
    %cst_26 = arith.constant dense<0.000000e+00> : vector<1x8xf32>
    %36 = vector.multi_reduction <add>, %33, %cst_26 [2] : vector<1x8x8xf32> to vector<1x8xf32>
    %37 = vector.shape_cast %36 : vector<1x8xf32> to vector<1x8x1xf32>
    %38 = arith.addf %35, %37 : vector<1x8x1xf32>
    %c0_27 = arith.constant 0 : index
    %c0_28 = arith.constant 0 : index
    %c0_29 = arith.constant 0 : index
    %39 = vector.load %arg14[%c0_27, %c0_28, %c0_29] : memref<1x8x1xf32, #tpu.memory_space<vmem>>, vector<1x8x1xf32>
    tpu.vector_store %arg14[%c0_27, %c0_28, %c0_29], %38 {strides = array<i32>} : memref<1x8x1xf32, #tpu.memory_space<vmem>>, vector<1x8x1xf32>,
    %c0_30 = arith.constant 0 : index
    %c0_31 = arith.constant 0 : index
    %c0_32 = arith.constant 0 : index
    %40 = vector.load %arg15[%c0_30, %c0_31, %c0_32] : memref<1x8x128xf32, #tpu.memory_space<vmem>>, vector<1x8x128xf32>
    %41 = vector.broadcast %30 : vector<1x8x1xf32> to vector<1x8x128xf32>
    %42 = arith.mulf %41, %40 : vector<1x8x128xf32>
    %43 = arith.truncf %33 : vector<1x8x8xf32> to vector<1x8x8xbf16>
    "tpu.trace_start"() <{level = 10 : i32, message = "bqk,bkd->bqd"}> : () -> ()
    %cst_33 = arith.constant dense<0.000000e+00> : vector<1x8x128xf32>
    %44 = tpu.matmul %43, %22, %cst_33 {dimension_numbers = #tpu.dot_dimension_numbers<[2], [1], [1], [2], [0, 0, 0, 1, 1, 2], [0], [0]>} : vector<1x8x8xbf16>, vector<1x8x128xbf16>, vector<1x8x128xf32> -> vector<1x8x128xf32>
    "tpu.trace_stop"() : () -> ()
    %45 = arith.addf %42, %44 : vector<1x8x128xf32>
    %c0_34 = arith.constant 0 : index
    %c0_35 = arith.constant 0 : index
    %c0_36 = arith.constant 0 : index
    %46 = vector.load %arg15[%c0_34, %c0_35, %c0_36] : memref<1x8x128xf32, #tpu.memory_space<vmem>>, vector<1x8x128xf32>
    tpu.vector_store %arg15[%c0_34, %c0_35, %c0_36], %45 {strides = array<i32>} : memref<1x8x128xf32, #tpu.memory_space<vmem>>, vector<1x8x128xf32>,
    %c0_37 = arith.constant 0 : index
    %c0_38 = arith.constant 0 : index
    %c0_39 = arith.constant 0 : index
    %47 = vector.load %arg13[%c0_37, %c0_38, %c0_39] : memref<1x8x1xf32, #tpu.memory_space<vmem>>, vector<1x8x1xf32>
    tpu.vector_store %arg13[%c0_37, %c0_38, %c0_39], %28 {strides = array<i32>} : memref<1x8x1xf32, #tpu.memory_space<vmem>>, vector<1x8x1xf32>,
    %c0_i32_40 = arith.constant 0 : i32
    %48 = arith.cmpi eq, %arg1, %c0_i32_40 : i32
    %49 = arith.extui %48 : i1 to i32
    %c0_i32_41 = arith.constant 0 : i32
    %50 = arith.cmpi ne, %49, %c0_i32_41 : i32
    scf.if %50 {
      %c0_42 = arith.constant 0 : index
      %c0_43 = arith.constant 0 : index
      %c0_44 = arith.constant 0 : index
      %51 = vector.load %arg15[%c0_42, %c0_43, %c0_44] : memref<1x8x128xf32, #tpu.memory_space<vmem>>, vector<1x8x128xf32>
      %c0_45 = arith.constant 0 : index
      %c0_46 = arith.constant 0 : index
      %c0_47 = arith.constant 0 : index
      %52 = vector.load %arg14[%c0_45, %c0_46, %c0_47] : memref<1x8x1xf32, #tpu.memory_space<vmem>>, vector<1x8x1xf32>
      %53 = tpu.reciprocal %52 {approx = true} : vector<1x8x1xf32> -> vector<1x8x1xf32>
      %54 = vector.broadcast %53 : vector<1x8x1xf32> to vector<1x8x128xf32>
      %55 = arith.mulf %51, %54 : vector<1x8x128xf32>
      %56 = vector.extract_strided_slice %55 {offsets = [0, 0, 0], sizes = [1, 8, 16], strides = [1, 1, 1]} : vector<1x8x128xf32> to vector<1x8x16xf32>
      %c0_48 = arith.constant 0 : index
      %c0_49 = arith.constant 0 : index
      %c0_50 = arith.constant 0 : index
      %57 = vector.load %arg11[%c0_48, %c0_49, %c0_50] : memref<1x8x16xf32, #tpu.memory_space<vmem>>, vector<1x8x16xf32>
      tpu.vector_store %arg11[%c0_48, %c0_49, %c0_50], %56 {strides = array<i32>} : memref<1x8x16xf32, #tpu.memory_space<vmem>>, vector<1x8x16xf32>,
    } else {
    }
    return
  }
  func.func @transform_0(%arg0: i32, %arg1: i32) -> (i32, i32, i32) {
    %c0_i32 = arith.constant 0 : i32
    %c0_i32_0 = arith.constant 0 : i32
    %c0_i32_1 = arith.constant 0 : i32
    return %arg0, %c0_i32, %c0_i32_0 : i32, i32, i32
  }
  func.func @transform_1(%arg0: i32, %arg1: i32) -> (i32, i32, i32) {
    %c0_i32 = arith.constant 0 : i32
    %c0_i32_0 = arith.constant 0 : i32
    return %arg0, %arg1, %c0_i32 : i32, i32, i32
  }
  func.func @transform_2(%arg0: i32, %arg1: i32) -> (i32, i32, i32) {
    %c0_i32 = arith.constant 0 : i32
    %c0_i32_0 = arith.constant 0 : i32
    return %arg0, %arg1, %c0_i32 : i32, i32, i32
  }
  func.func @transform_3(%arg0: i32, %arg1: i32) -> (i32, i32) {
    %c0_i32 = arith.constant 0 : i32
    %c0_i32_0 = arith.constant 0 : i32
    %c0_i32_1 = arith.constant 0 : i32
    return %c0_i32, %c0_i32_0 : i32, i32
  }
  func.func @transform_4(%arg0: i32, %arg1: i32) -> (i32, i32) {
    %c0_i32 = arith.constant 0 : i32
    %c0_i32_0 = arith.constant 0 : i32
    %c0_i32_1 = arith.constant 0 : i32
    return %c0_i32, %c0_i32_0 : i32, i32
  }
  func.func @transform_5(%arg0: i32, %arg1: i32) -> (i32, i32) {
    %c0_i32 = arith.constant 0 : i32
    %c0_i32_0 = arith.constant 0 : i32
    %c0_i32_1 = arith.constant 0 : i32
    return %c0_i32, %c0_i32_0 : i32, i32
  }
  func.func @transform_6(%arg0: i32, %arg1: i32) -> (i32, i32) {
    %c0_i32 = arith.constant 0 : i32
    %c0_i32_0 = arith.constant 0 : i32
    %c0_i32_1 = arith.constant 0 : i32
    return %c0_i32, %c0_i32_0 : i32, i32
  }
  func.func @transform_7(%arg0: i32, %arg1: i32) -> (i32, i32) {
    %c0_i32 = arith.constant 0 : i32
    %c0_i32_0 = arith.constant 0 : i32
    %c0_i32_1 = arith.constant 0 : i32
    return %c0_i32, %c0_i32_0 : i32, i32
  }
  func.func @transform_8(%arg0: i32, %arg1: i32) -> (i32, i32) {
    %c0_i32 = arith.constant 0 : i32
    %c0_i32_0 = arith.constant 0 : i32
    %c0_i32_1 = arith.constant 0 : i32
    return %c0_i32, %c0_i32_0 : i32, i32
  }
  func.func @transform_9(%arg0: i32, %arg1: i32) -> (i32, i32, i32) {
    %c0_i32 = arith.constant 0 : i32
    %c0_i32_0 = arith.constant 0 : i32
    %c0_i32_1 = arith.constant 0 : i32
    return %arg0, %c0_i32, %c0_i32_0 : i32, i32, i32
  }
}

</mosaic_0001>

<llo_original>
// kernel: tpu_custom_call.1
$region0: #{tpu_custom_call.1}
  #allocation0 [shape = 'u32[]', space=smem, size = 0x4, offset = 0x4, fixed_abs, tag = 'smem constant byte address 0x4 - core index']
  #allocation1 [shape = 'u32[144,128]{1,0:T(1,128)}', space=vmem, size = 0x12000, scoped, tag = 'internal scratch']
  #allocation2 [shape = 'bf16[1,8,128]{2,1,0:T(8,128)(2,1)}', space=vmem, size = 0x800, scoped, tag = 'scratch operand']
  #allocation3 [shape = 'f32[1,8,1]{2,1,0:T(8,128)}', space=vmem, size = 0x1000, scoped, tag = 'scratch operand']
  #allocation4 [shape = 'f32[1,8,1]{2,1,0:T(8,128)}', space=vmem, size = 0x1000, scoped, tag = 'scratch operand']
  #allocation5 [shape = 'f32[1,8,128]{2,1,0:T(8,128)}', space=vmem, size = 0x1000, scoped, tag = 'scratch operand']
  %s0 = inlined_call_operand.hbm [shape: f32[2,8,32], index: 0, kind: input, shape index: {}]
  %s1 = inlined_call_operand.hbm [shape: f32[2,8,32], index: 1, kind: input, shape index: {}]
  %s2 = inlined_call_operand.hbm [shape: f32[2,8,32], index: 2, kind: input, shape index: {}]
  %s3 = inlined_call_operand.hbm [shape: bf16[32,128], index: 3, kind: input, shape index: {}]
  %s4 = inlined_call_operand.vmem [shape: f32[1,128], index: 4, kind: input, shape index: {}]
  %s5 = inlined_call_operand.vmem [shape: bf16[32,128], index: 5, kind: input, shape index: {}]
  %s6 = inlined_call_operand.vmem [shape: f32[1,128], index: 6, kind: input, shape index: {}]
  %s7 = inlined_call_operand.hbm [shape: bf16[32,128], index: 7, kind: input, shape index: {}]
  %s8 = inlined_call_operand.vmem [shape: f32[1,128], index: 8, kind: input, shape index: {}]
  %s9 = inlined_call_operand.hbm [shape: f32[2,8,16], index: 9, kind: output, shape index: {}]
  %s10 = sld [smem:[#allocation0]]
  $region97: #{tpu_custom_call.1} parent=0
    _
  %s12 = ssub.s32 1, %s10
  %s13 = scalar_select 0, %s12, %s10
  $region1: #{tpu_custom_call.1} parent=0
    #allocation6 [shape = 'u8[8192]{0}', space=vmem, size = 0x2000, scoped, tag = 'input window, operand 0']
    #allocation7 [shape = 's32[2]{0}', space=sflag, size = 0x8, scoped, tag = 'scoped memory for tpu_custom_call.1']
    #allocation8 [shape = 's32[2]{0}', space=sflag, size = 0x8, scoped, tag = 'scoped memory for tpu_custom_call.1']
    #allocation9 [shape = 'u8[8192]{0}', space=vmem, size = 0x2000, scoped, tag = 'input window, operand 1']
    #allocation10 [shape = 's32[2]{0}', space=sflag, size = 0x8, scoped, tag = 'scoped memory for tpu_custom_call.1']
    #allocation11 [shape = 'u8[8192]{0}', space=vmem, size = 0x2000, scoped, tag = 'input window, operand 2']
    #allocation12 [shape = 'u8[8192]{0}', space=vmem, size = 0x2000, scoped, tag = 'input window, operand 3, single buffered']
    #allocation13 [shape = 's32[1]{0}', space=sflag, size = 0x4, scoped, tag = 'scoped memory for tpu_custom_call.1']
    #allocation14 [shape = 'u8[8192]{0}', space=vmem, size = 0x2000, scoped, tag = 'input window, operand 7, single buffered']
    #allocation15 [shape = 'u8[8192]{0}', space=vmem, size = 0x2000, scoped, tag = 'output window, operand 0']
    %14 = vsyncpa [#allocation7], 0
    %s15 = scalar_lea.sflag [#allocation7], 1
    %16 = vsyncpa %s15, 0
    %17 = vsyncpa [#allocation10], 0
    %s18 = scalar_lea.sflag [#allocation10], 1
    %19 = vsyncpa %s18, 0
    %20 = vsyncpa [#allocation13], 0
    %21 = vsyncpa [#allocation8], 0
    %s22 = scalar_lea.sflag [#allocation8], 1
    %23 = vsyncpa %s22, 0
    loop: start=0, step=1, limit=4
    $region2: #{tpu_custom_call.1} parent=1 // loop_pre_header
      _
    $region3: #{tpu_custom_call.1} parent=1 // loop_header
      %s25 = sphi 0, %s29
      %p26 = scmp.ge.s32.totalorder %s25, 4
      %s32 = sphi 0, %s44
      %s33 = sphi 0, %s40
      %s34 = sphi 0, %s32
      %s35 = sphi 0, %s33
      %s36 = sphi 0, %s34
      %s37 = sphi 0, %s35
      %s47 = sphi 0, %s49
      %s50 = sphi 0, %s47
      %s51 = sphi 0, %s50
      %s67 = sphi 0, %s51
      %s75 = sphi 0, %s77
      %s78 = sphi 0, %s75
      %s79 = sphi 0, %s78
      %s95 = sphi 0, %s79
      %s103 = sphi 0, %s105
      %s106 = sphi 0, %s103
      %s107 = sphi 0, %s106
      %s123 = sphi 0, %s107
      %s127 = sphi 0, %s127
      %s129 = sphi 0, %s127
      %s130 = sphi 0, %s129
      %s144 = sphi 0, %s130
      %s148 = sphi 0, %s148
      %s150 = sphi 0, %s148
      %s151 = sphi 0, %s150
      %s165 = sphi 0, %s151
      %s169 = sphi 0, %s169
      %s171 = sphi 0, %s169
      %s172 = sphi 0, %s171
      %s186 = sphi 0, %s172
      %s190 = sphi 0, %s190
      %s192 = sphi 0, %s190
      %s193 = sphi 0, %s192
      %s207 = sphi 0, %s193
      %s211 = sphi 0, %s211
      %s213 = sphi 0, %s211
      %s214 = sphi 0, %s213
      %s228 = sphi 0, %s214
      %s232 = sphi 0, %s232
      %s234 = sphi 0, %s232
      %s235 = sphi 0, %s234
      %s249 = sphi 0, %s235
      %s255 = sphi 0, %s257
      %s258 = sphi 0, %s255
      %s259 = sphi 0, %s258
      %s275 = sphi 0, %s259
    $region4: #{tpu_custom_call.1} parent=1 // loop_header_branch
      %28 = sbr.rel (%p26) target = $region8
    $region5: #{tpu_custom_call.1} parent=1 // loop_body
      %s30 = ssub.s32 %s25, 1
      %s31 = ssub.s32 %s25, 2
      %s38 = sadd.s32 1, %s33
      %p39 = scmp.ge.s32.totalorder %s38, 1
      %s40 = scalar_select %p39, 0, %s38
      %s41 = sadd.s32 1, %s32
      %s42 = scalar_select %p39, %s41, %s32
      %p43 = scmp.ge.s32.totalorder %s42, 2
      %s44 = scalar_select %p43, 0, %s42
      %s45 = ssub.s32 %s32, %s44
      %p46 = scmp.eq.s32.totalorder %s45, 0
      %s48 = sadd.s32 %s47, 1
      %s49 = scalar_select %p46, %s47, %s48
      %p52 = pneg %p46
      %p53 = scmp.eq.s32.totalorder %s25, 1
      %p54 = por %p52, %p53
      %p55 = scmp.ne.s32.totalorder %s47, %s50
      %p56 = scmp.eq.s32.totalorder %s25, 0
      %p57 = por %p55, %p56
      %p58 = scmp.ne.s32.totalorder %s47, %s50
      %p59 = scmp.eq.s32.totalorder %s30, 1
      %p60 = por %p58, %p59
      %p61 = scmp.ne.s32.totalorder %s50, %s51
      %p62 = scmp.eq.s32.totalorder %s30, 0
      %p63 = por %p61, %p62
      %p64 = scmp.ne.s32.totalorder %s50, %s51
      %p65 = scmp.eq.s32.totalorder %s31, 1
      %p66 = por %p64, %p65
      %p68 = scmp.ne.s32.totalorder %s51, %s67
      %p69 = scmp.eq.s32.totalorder %s31, 0
      %p70 = por %p68, %p69
      %s71 = ssub.s32 %s32, %s44
      %s72 = ssub.s32 %s33, %s40
      %s73 = sor.u32 %s71, %s72
      %p74 = scmp.eq.s32.totalorder %s73, 0
      %s76 = sadd.s32 %s75, 1
      %s77 = scalar_select %p74, %s75, %s76
      %p80 = pneg %p74
      %p81 = scmp.eq.s32.totalorder %s25, 1
      %p82 = por %p80, %p81
      %p83 = scmp.ne.s32.totalorder %s75, %s78
      %p84 = scmp.eq.s32.totalorder %s25, 0
      %p85 = por %p83, %p84
      %p86 = scmp.ne.s32.totalorder %s75, %s78
      %p87 = scmp.eq.s32.totalorder %s30, 1
      %p88 = por %p86, %p87
      %p89 = scmp.ne.s32.totalorder %s78, %s79
      %p90 = scmp.eq.s32.totalorder %s30, 0
      %p91 = por %p89, %p90
      %p92 = scmp.ne.s32.totalorder %s78, %s79
      %p93 = scmp.eq.s32.totalorder %s31, 1
      %p94 = por %p92, %p93
      %p96 = scmp.ne.s32.totalorder %s79, %s95
      %p97 = scmp.eq.s32.totalorder %s31, 0
      %p98 = por %p96, %p97
      %s99 = ssub.s32 %s32, %s44
      %s100 = ssub.s32 %s33, %s40
      %s101 = sor.u32 %s99, %s100
      %p102 = scmp.eq.s32.totalorder %s101, 0
      %s104 = sadd.s32 %s103, 1
      %s105 = scalar_select %p102, %s103, %s104
      %p108 = pneg %p102
      %p109 = scmp.eq.s32.totalorder %s25, 1
      %p110 = por %p108, %p109
      %p111 = scmp.ne.s32.totalorder %s103, %s106
      %p112 = scmp.eq.s32.totalorder %s25, 0
      %p113 = por %p111, %p112
      %p114 = scmp.ne.s32.totalorder %s103, %s106
      %p115 = scmp.eq.s32.totalorder %s30, 1
      %p116 = por %p114, %p115
      %p117 = scmp.ne.s32.totalorder %s106, %s107
      %p118 = scmp.eq.s32.totalorder %s30, 0
      %p119 = por %p117, %p118
      %p120 = scmp.ne.s32.totalorder %s106, %s107
      %p121 = scmp.eq.s32.totalorder %s31, 1
      %p122 = por %p120, %p121
      %p124 = scmp.ne.s32.totalorder %s107, %s123
      %p125 = scmp.eq.s32.totalorder %s31, 0
      %p126 = por %p124, %p125
      %s128 = sadd.s32 %s127, 1
      %p131 = scmp.eq.s32.totalorder %s25, 1
      %p132 = scmp.ne.s32.totalorder %s127, %s129
      %p133 = scmp.eq.s32.totalorder %s25, 0
      %p134 = por %p132, %p133
      %p135 = scmp.ne.s32.totalorder %s127, %s129
      %p136 = scmp.eq.s32.totalorder %s30, 1
      %p137 = por %p135, %p136
      %p138 = scmp.ne.s32.totalorder %s129, %s130
      %p139 = scmp.eq.s32.totalorder %s30, 0
      %p140 = por %p138, %p139
      %p141 = scmp.ne.s32.totalorder %s129, %s130
      %p142 = scmp.eq.s32.totalorder %s31, 1
      %p143 = por %p141, %p142
      %p145 = scmp.ne.s32.totalorder %s130, %s144
      %p146 = scmp.eq.s32.totalorder %s31, 0
      %p147 = por %p145, %p146
      %s149 = sadd.s32 %s148, 1
      %p152 = scmp.eq.s32.totalorder %s25, 1
      %p153 = scmp.ne.s32.totalorder %s148, %s150
      %p154 = scmp.eq.s32.totalorder %s25, 0
      %p155 = por %p153, %p154
      %p156 = scmp.ne.s32.totalorder %s148, %s150
      %p157 = scmp.eq.s32.totalorder %s30, 1
      %p158 = por %p156, %p157
      %p159 = scmp.ne.s32.totalorder %s150, %s151
      %p160 = scmp.eq.s32.totalorder %s30, 0
      %p161 = por %p159, %p160
      %p162 = scmp.ne.s32.totalorder %s150, %s151
      %p163 = scmp.eq.s32.totalorder %s31, 1
      %p164 = por %p162, %p163
      %p166 = scmp.ne.s32.totalorder %s151, %s165
      %p167 = scmp.eq.s32.totalorder %s31, 0
      %p168 = por %p166, %p167
      %s170 = sadd.s32 %s169, 1
      %p173 = scmp.eq.s32.totalorder %s25, 1
      %p174 = scmp.ne.s32.totalorder %s169, %s171
      %p175 = scmp.eq.s32.totalorder %s25, 0
      %p176 = por %p174, %p175
      %p177 = scmp.ne.s32.totalorder %s169, %s171
      %p178 = scmp.eq.s32.totalorder %s30, 1
      %p179 = por %p177, %p178
      %p180 = scmp.ne.s32.totalorder %s171, %s172
      %p181 = scmp.eq.s32.totalorder %s30, 0
      %p182 = por %p180, %p181
      %p183 = scmp.ne.s32.totalorder %s171, %s172
      %p184 = scmp.eq.s32.totalorder %s31, 1
      %p185 = por %p183, %p184
      %p187 = scmp.ne.s32.totalorder %s172, %s186
      %p188 = scmp.eq.s32.totalorder %s31, 0
      %p189 = por %p187, %p188
      %s191 = sadd.s32 %s190, 1
      %p194 = scmp.eq.s32.totalorder %s25, 1
      %p195 = scmp.ne.s32.totalorder %s190, %s192
      %p196 = scmp.eq.s32.totalorder %s25, 0
      %p197 = por %p195, %p196
      %p198 = scmp.ne.s32.totalorder %s190, %s192
      %p199 = scmp.eq.s32.totalorder %s30, 1
      %p200 = por %p198, %p199
      %p201 = scmp.ne.s32.totalorder %s192, %s193
      %p202 = scmp.eq.s32.totalorder %s30, 0
      %p203 = por %p201, %p202
      %p204 = scmp.ne.s32.totalorder %s192, %s193
      %p205 = scmp.eq.s32.totalorder %s31, 1
      %p206 = por %p204, %p205
      %p208 = scmp.ne.s32.totalorder %s193, %s207
      %p209 = scmp.eq.s32.totalorder %s31, 0
      %p210 = por %p208, %p209
      %s212 = sadd.s32 %s211, 1
      %p215 = scmp.eq.s32.totalorder %s25, 1
      %p216 = scmp.ne.s32.totalorder %s211, %s213
      %p217 = scmp.eq.s32.totalorder %s25, 0
      %p218 = por %p216, %p217
      %p219 = scmp.ne.s32.totalorder %s211, %s213
      %p220 = scmp.eq.s32.totalorder %s30, 1
      %p221 = por %p219, %p220
      %p222 = scmp.ne.s32.totalorder %s213, %s214
      %p223 = scmp.eq.s32.totalorder %s30, 0
      %p224 = por %p222, %p223
      %p225 = scmp.ne.s32.totalorder %s213, %s214
      %p226 = scmp.eq.s32.totalorder %s31, 1
      %p227 = por %p225, %p226
      %p229 = scmp.ne.s32.totalorder %s214, %s228
      %p230 = scmp.eq.s32.totalorder %s31, 0
      %p231 = por %p229, %p230
      %s233 = sadd.s32 %s232, 1
      %p236 = scmp.eq.s32.totalorder %s25, 1
      %p237 = scmp.ne.s32.totalorder %s232, %s234
      %p238 = scmp.eq.s32.totalorder %s25, 0
      %p239 = por %p237, %p238
      %p240 = scmp.ne.s32.totalorder %s232, %s234
      %p241 = scmp.eq.s32.totalorder %s30, 1
      %p242 = por %p240, %p241
      %p243 = scmp.ne.s32.totalorder %s234, %s235
      %p244 = scmp.eq.s32.totalorder %s30, 0
      %p245 = por %p243, %p244
      %p246 = scmp.ne.s32.totalorder %s234, %s235
      %p247 = scmp.eq.s32.totalorder %s31, 1
      %p248 = por %p246, %p247
      %p250 = scmp.ne.s32.totalorder %s235, %s249
      %p251 = scmp.eq.s32.totalorder %s31, 0
      %p252 = por %p250, %p251
      %s253 = ssub.s32 %s32, %s44
      %p254 = scmp.eq.s32.totalorder %s253, 0
      %s256 = sadd.s32 %s255, 1
      %s257 = scalar_select %p254, %s255, %s256
      %p260 = pneg %p254
      %p261 = scmp.eq.s32.totalorder %s25, 1
      %p262 = por %p260, %p261
      %p263 = scmp.ne.s32.totalorder %s255, %s258
      %p264 = scmp.eq.s32.totalorder %s25, 0
      %p265 = por %p263, %p264
      %p266 = scmp.ne.s32.totalorder %s255, %s258
      %p267 = scmp.eq.s32.totalorder %s30, 1
      %p268 = por %p266, %p267
      %p269 = scmp.ne.s32.totalorder %s258, %s259
      %p270 = scmp.eq.s32.totalorder %s30, 0
      %p271 = por %p269, %p270
      %p272 = scmp.ne.s32.totalorder %s258, %s259
      %p273 = scmp.eq.s32.totalorder %s31, 1
      %p274 = por %p272, %p273
      %p276 = scmp.ne.s32.totalorder %s259, %s275
      %p277 = scmp.eq.s32.totalorder %s31, 0
      %p278 = por %p276, %p277
      %p279 = scmp.le.s32.totalorder 1, %s25
      %p280 = scmp.lt.s32.totalorder %s25, 3
      %p281 = pnand %p279, %p280
      %p282 = pneg %p281
      // Predicated region
      $region9: #{tpu_custom_call.1} parent=5 // pred_check
        _
      $region10: #{tpu_custom_call.1} parent=5 // pred_check_branch
        %284 = sbr.rel (%p281) target = $region12
      $region11: #{tpu_custom_call.1} parent=5 // pred_region
        %s285 = ssub.s32 %s25, 1
        // Predicated region
        $region13: #{tpu_custom_call.1} parent=11 // pred_check
          %p286 = pneg %p140
        $region14: #{tpu_custom_call.1} parent=11 // pred_check_branch
          %288 = sbr.rel (%p286) target = $region16
        $region15: #{tpu_custom_call.1} parent=11 // pred_region
          %s290 = ssub.s32 256, 256
          %291 = vsyncadd [#allocation13], %s290
          %s292 = sshll.u32 [#allocation12], 4
          %s293 = int_to_ptr.vmem [resolvable:$true] %s292
          %298 = dma.hbm_to_vmem [thread:$0]  %s3, 256, %s293, [#allocation13], 64, 64, 4
        $region16: #{tpu_custom_call.1} parent=11 // pred_fallthru
          _
        // Predicated region
        $region17: #{tpu_custom_call.1} parent=11 // pred_check
          %p299 = pneg %p161
        $region18: #{tpu_custom_call.1} parent=11 // pred_check_branch
          %301 = sbr.rel (%p299) target = $region20
        $region19: #{tpu_custom_call.1} parent=11 // pred_region
          _
        $region20: #{tpu_custom_call.1} parent=11 // pred_fallthru
          _
        // Predicated region
        $region21: #{tpu_custom_call.1} parent=11 // pred_check
          %p302 = pneg %p182
        $region22: #{tpu_custom_call.1} parent=11 // pred_check_branch
          %304 = sbr.rel (%p302) target = $region24
        $region23: #{tpu_custom_call.1} parent=11 // pred_region
          _
        $region24: #{tpu_custom_call.1} parent=11 // pred_fallthru
          _
        // Predicated region
        $region25: #{tpu_custom_call.1} parent=11 // pred_check
          %p305 = pneg %p203
        $region26: #{tpu_custom_call.1} parent=11 // pred_check_branch
          %307 = sbr.rel (%p305) target = $region28
        $region27: #{tpu_custom_call.1} parent=11 // pred_region
          _
        $region28: #{tpu_custom_call.1} parent=11 // pred_fallthru
          _
        // Predicated region
        $region29: #{tpu_custom_call.1} parent=11 // pred_check
          %p308 = pneg %p224
        $region30: #{tpu_custom_call.1} parent=11 // pred_check_branch
          %310 = sbr.rel (%p308) target = $region32
        $region31: #{tpu_custom_call.1} parent=11 // pred_region
          %s312 = ssub.s32 256, 256
          %313 = vsyncadd [#allocation13], %s312
          %s314 = sshll.u32 [#allocation14], 4
          %s315 = int_to_ptr.vmem [resolvable:$true] %s314
          %320 = dma.hbm_to_vmem [thread:$0]  %s7, 256, %s315, [#allocation13], 64, 64, 4
        $region32: #{tpu_custom_call.1} parent=11 // pred_fallthru
          _
        // Predicated region
        $region33: #{tpu_custom_call.1} parent=11 // pred_check
          %p321 = pneg %p245
        $region34: #{tpu_custom_call.1} parent=11 // pred_check_branch
          %323 = sbr.rel (%p321) target = $region36
        $region35: #{tpu_custom_call.1} parent=11 // pred_region
          _
        $region36: #{tpu_custom_call.1} parent=11 // pred_fallthru
          _
      $region12: #{tpu_custom_call.1} parent=5 // pred_fallthru
        _
      %p324 = scmp.lt.s32.totalorder %s25, 2
      // Predicated region
      $region37: #{tpu_custom_call.1} parent=5 // pred_check
        %p325 = pneg %p324
      $region38: #{tpu_custom_call.1} parent=5 // pred_check_branch
        %327 = sbr.rel (%p325) target = $region40
      $region39: #{tpu_custom_call.1} parent=5 // pred_region
        // Predicated region
        $region41: #{tpu_custom_call.1} parent=39 // pred_check
          %p328 = pneg %p57
        $region42: #{tpu_custom_call.1} parent=39 // pred_check_branch
          %330 = sbr.rel (%p328) target = $region44
        $region43: #{tpu_custom_call.1} parent=39 // pred_region
          %s331 = sand.u32 %s47, 1
          %s332 = scalar_lea.sflag [#allocation7], %s331
          %s333 = sand.u32 %s47, 1
          %s334 = smul.addr %s333, 8
          %s335 = scalar_lea.vmem [#allocation6], %s334
          %s337 = ssub.s32 128, 128
          %338 = vsyncadd %s332, %s337
          %s339 = smul.addr %s32, 128
          %s340 = scalar_lea.hbm %s0, %s339
          %s342 = sshll.u32 %s335, 4
          %s343 = int_to_ptr.vmem [resolvable:$true] %s342
          %345 = dma.hbm_to_vmem [thread:$0]  %s340, 128, %s343, %s332
        $region44: #{tpu_custom_call.1} parent=39 // pred_fallthru
          _
        // Predicated region
        $region45: #{tpu_custom_call.1} parent=39 // pred_check
          %p346 = pneg %p85
        $region46: #{tpu_custom_call.1} parent=39 // pred_check_branch
          %348 = sbr.rel (%p346) target = $region48
        $region47: #{tpu_custom_call.1} parent=39 // pred_region
          %s349 = sand.u32 %s25, 1
          %s350 = scalar_lea.sflag [#allocation10], %s349
          %s351 = sand.u32 %s75, 1
          %s352 = smul.addr %s351, 8
          %s353 = scalar_lea.vmem [#allocation9], %s352
          %s355 = ssub.s32 128, 128
          %356 = vsyncadd %s350, %s355
          %s357 = sadd.s32 %s33, %s32
          %s358 = smul.addr %s357, 128
          %s359 = scalar_lea.hbm %s1, %s358
          %s361 = sshll.u32 %s353, 4
          %s362 = int_to_ptr.vmem [resolvable:$true] %s361
          %364 = dma.hbm_to_vmem [thread:$0]  %s359, 128, %s362, %s350
        $region48: #{tpu_custom_call.1} parent=39 // pred_fallthru
          _
        // Predicated region
        $region49: #{tpu_custom_call.1} parent=39 // pred_check
          %p365 = pneg %p113
        $region50: #{tpu_custom_call.1} parent=39 // pred_check_branch
          %367 = sbr.rel (%p365) target = $region52
        $region51: #{tpu_custom_call.1} parent=39 // pred_region
          %s368 = sand.u32 %s25, 1
          %s369 = scalar_lea.sflag [#allocation10], %s368
          %s370 = sand.u32 %s103, 1
          %s371 = smul.addr %s370, 8
          %s372 = scalar_lea.vmem [#allocation11], %s371
          %s374 = ssub.s32 128, 128
          %375 = vsyncadd %s369, %s374
          %s376 = sadd.s32 %s33, %s32
          %s377 = smul.addr %s376, 128
          %s378 = scalar_lea.hbm %s2, %s377
          %s380 = sshll.u32 %s372, 4
          %s381 = int_to_ptr.vmem [resolvable:$true] %s380
          %383 = dma.hbm_to_vmem [thread:$0]  %s378, 128, %s381, %s369
        $region52: #{tpu_custom_call.1} parent=39 // pred_fallthru
          _
      $region40: #{tpu_custom_call.1} parent=5 // pred_fallthru
        _
      %p384 = scmp.le.s32.totalorder 1, %s25
      %p385 = scmp.lt.s32.totalorder %s25, 3
      %p386 = pnand %p384, %p385
      %p387 = pneg %p386
      // Predicated region
      $region53: #{tpu_custom_call.1} parent=5 // pred_check
        _
      $region54: #{tpu_custom_call.1} parent=5 // pred_check_branch
        %389 = sbr.rel (%p386) target = $region56
      $region55: #{tpu_custom_call.1} parent=5 // pred_region
        %s390 = ssub.s32 %s25, 1
        %s391 = sand.u32 %s50, 1
        %s392 = scalar_lea.sflag [#allocation7], %s391
        %s393 = sand.u32 %s50, 1
        %s394 = smul.addr %s393, 8
        %s395 = scalar_lea.vmem [#allocation6], %s394
        // Predicated region
        $region57: #{tpu_custom_call.1} parent=55 // pred_check
          %p396 = pneg %p63
        $region58: #{tpu_custom_call.1} parent=55 // pred_check_branch
          %398 = sbr.rel (%p396) target = $region60
        $region59: #{tpu_custom_call.1} parent=55 // pred_region
          %399 = dma.done %s392, 128
        $region60: #{tpu_custom_call.1} parent=55 // pred_fallthru
          _
        %s400 = sand.u32 %s30, 1
        %s401 = scalar_lea.sflag [#allocation10], %s400
        %s402 = sand.u32 %s78, 1
        %s403 = smul.addr %s402, 8
        %s404 = scalar_lea.vmem [#allocation9], %s403
        // Predicated region
        $region61: #{tpu_custom_call.1} parent=55 // pred_check
          %p405 = pneg %p91
        $region62: #{tpu_custom_call.1} parent=55 // pred_check_branch
          %407 = sbr.rel (%p405) target = $region64
        $region63: #{tpu_custom_call.1} parent=55 // pred_region
          %408 = dma.done %s401, 128
        $region64: #{tpu_custom_call.1} parent=55 // pred_fallthru
          _
        %s409 = sand.u32 %s30, 1
        %s410 = scalar_lea.sflag [#allocation10], %s409
        %s411 = sand.u32 %s106, 1
        %s412 = smul.addr %s411, 8
        %s413 = scalar_lea.vmem [#allocation11], %s412
        // Predicated region
        $region65: #{tpu_custom_call.1} parent=55 // pred_check
          %p414 = pneg %p119
        $region66: #{tpu_custom_call.1} parent=55 // pred_check_branch
          %416 = sbr.rel (%p414) target = $region68
        $region67: #{tpu_custom_call.1} parent=55 // pred_region
          %417 = dma.done %s410, 128
        $region68: #{tpu_custom_call.1} parent=55 // pred_fallthru
          _
        // Predicated region
        $region69: #{tpu_custom_call.1} parent=55 // pred_check
          %p418 = pneg %p140
        $region70: #{tpu_custom_call.1} parent=55 // pred_check_branch
          %420 = sbr.rel (%p418) target = $region72
        $region71: #{tpu_custom_call.1} parent=55 // pred_region
          %421 = dma.done [#allocation13], 256
        $region72: #{tpu_custom_call.1} parent=55 // pred_fallthru
          _
        // Predicated region
        $region73: #{tpu_custom_call.1} parent=55 // pred_check
          %p422 = pneg %p224
        $region74: #{tpu_custom_call.1} parent=55 // pred_check_branch
          %424 = sbr.rel (%p422) target = $region76
        $region75: #{tpu_custom_call.1} parent=55 // pred_region
          %425 = dma.done [#allocation13], 256
        $region76: #{tpu_custom_call.1} parent=55 // pred_fallthru
          _
        %s426 = sand.u32 %s50, 1
        %s427 = scalar_lea.sflag [#allocation7], %s426
        %s428 = sand.u32 %s50, 1
        %s429 = smul.addr %s428, 8
        %s430 = scalar_lea.vmem [#allocation6], %s429
        %p431 = pneg %p63
        %p432 = pneg %p60
        %s433 = sand.u32 %s30, 1
        %s434 = scalar_lea.sflag [#allocation10], %s433
        %s435 = sand.u32 %s78, 1
        %s436 = smul.addr %s435, 8
        %s437 = scalar_lea.vmem [#allocation9], %s436
        %p438 = pneg %p91
        %p439 = pneg %p88
        %s440 = sand.u32 %s30, 1
        %s441 = scalar_lea.sflag [#allocation10], %s440
        %s442 = sand.u32 %s106, 1
        %s443 = smul.addr %s442, 8
        %s444 = scalar_lea.vmem [#allocation11], %s443
        %p445 = pneg %p119
        %p446 = pneg %p116
        %p447 = pneg %p140
        %p448 = pneg %p137
        %p449 = pneg %p161
        %p450 = pneg %p158
        %p451 = pneg %p182
        %p452 = pneg %p179
        %p453 = pneg %p203
        %p454 = pneg %p200
        %p455 = pneg %p224
        %p456 = pneg %p221
        %p457 = pneg %p245
        %p458 = pneg %p242
        %p459 = pneg %p271
        %p460 = pneg %p268
        %s461 = sand.u32 %s258, 1
        %s462 = scalar_lea.sflag [#allocation8], %s461
        %s463 = sand.u32 %s258, 1
        %s464 = smul.addr %s463, 8
        %s465 = scalar_lea.vmem [#allocation15], %s464
        %p467 = scmp.eq.s32.totalorder %s35, 0
        // Predicated region
        $region77: #{tpu_custom_call.1} parent=55 // pred_check
          %p468 = pneg %p467
        $region78: #{tpu_custom_call.1} parent=55 // pred_check_branch
          %470 = sbr.rel (%p468) target = $region80
        $region79: #{tpu_custom_call.1} parent=55 // pred_region
          %v471 = vld [vmem:[%s395] sm:$0xff]
          %v472 = vpack.c.bf16 %v471, %v471
          %v473 = vld [vmem:[#allocation12] sm:$0xf]
          %v474 = vld [vmem:[#allocation12 + $0x4] sm:$0xf]
          %v475 = vld [vmem:[#allocation12 + $0x8] sm:$0xf]
          %v476 = vld [vmem:[#allocation12 + $0xc] sm:$0xf]
          %v477 = vld [vmem:[%s4] sm:$0x1]
          %v479 = vlaneseq
          %v480 = vshrl.u32 %v479, 7
          %v481 = vsub.s32 0, %v480
          %v482 = vrot.slane %v477, %v481
          %v488 = vunpack.c.l.b16 %v473
          %v489 = vunpack.c.l.b16 %v474
          %v490 = vunpack.c.l.b16 %v475
          %v491 = vunpack.c.l.b16 %v476
          %v492 = vpack.c.b16 %v489, %v488
          %v493 = vpack.c.b16 %v491, %v490
          %vm496 = vcmask 261120
          %v498 = vsel %vm496, %v472, 0
          %500 = vmatprep.subr.bf16.mxu0 0
          %501 = vmatpush1.bf16.msra.mxu0 %v492
          %502 = vmatprep.subr.bf16.mxu0 0
          %503 = vmatpush1.bf16.msra.mxu0 %v493
          %504 = vmatprep.subr.bf16.mxu0 0
          %505 = vmatpush1.bf16.msra.mxu0 0
          %506 = vmatprep.subr.bf16.mxu0 0
          %507 = vmatpush1.bf16.msra.mxu0 0
          %508 = vmatprep.subr.bf16.mxu0 0
          %509 = vmatpush1.bf16.msra.mxu0 0
          %510 = vmatprep.subr.bf16.mxu0 0
          %511 = vmatpush1.bf16.msra.mxu0 0
          %512 = vmatprep.subr.bf16.mxu0 0
          %513 = vmatpush1.bf16.msra.mxu0 0
          %514 = vmatprep.subr.bf16.mxu0 0
          %515 = vmatpush1.bf16.msra.mxu0 0
          %516 = vmatprep.subr.bf16.mxu0 0
          %517 = vmatpush1.bf16.msra.mxu0 0
          %518 = vmatprep.subr.bf16.mxu0 0
          %519 = vmatpush1.bf16.msra.mxu0 0
          %520 = vmatprep.subr.bf16.mxu0 0
          %521 = vmatpush1.bf16.msra.mxu0 0
          %522 = vmatprep.subr.bf16.mxu0 0
          %523 = vmatpush1.bf16.msra.mxu0 0
          %524 = vmatprep.subr.bf16.mxu0 0
          %525 = vmatpush1.bf16.msra.mxu0 0
          %526 = vmatprep.subr.bf16.mxu0 0
          %527 = vmatpush1.bf16.msra.mxu0 0
          %528 = vmatprep.subr.bf16.mxu0 0
          %529 = vmatpush1.bf16.msra.mxu0 0
          %530 = vmatprep.subr.bf16.mxu0 0
          %531 = vmatpush1.bf16.msra.mxu0 0
          %532 = vmatprep.mubr.bf16.mxu0 0
          %533 = vmatmul.mubr.bf16.gmra.mrb[0].mxu0 %v498
          %v534 = vpop.f32.mrb[0].mxu0
          %v535 = vadd.f32 %v482, %v534
          %v536 = vpop.f32.mrb[0].mxu0
          %v537 = vpop.f32.mrb[0].mxu0
          %v538 = vpop.f32.mrb[0].mxu0
          %539 = vdwg.mxu0
          %v540 = vpack.c.bf16 %v535, %v535
          %541 = vst [vmem:[#allocation2] sm:$0xf] %v540
          %vm542 = vcmask 7168
          %543 = vst.msk [vmem:[#allocation3] sm:$0xff] %vm542, -inf
          %544 = vst.msk [vmem:[#allocation4] sm:$0xff] %vm542, 0.0
          %545 = vst [vmem:[#allocation5] sm:$0xff] 0.0
        $region80: #{tpu_custom_call.1} parent=55 // pred_fallthru
          _
        %v546 = vld [vmem:[%s404] sm:$0xff]
        %v547 = vpack.c.bf16 %v546, %v546
        %v548 = vld [vmem:[%s413] sm:$0xff]
        %v549 = vpack.c.bf16 %v548, %v548
        %v550 = vld [vmem:[%s5] sm:$0xf]
        %v551 = vld [vmem:[%s5 + $0x4] sm:$0xf]
        %v552 = vld [vmem:[%s5 + $0x8] sm:$0xf]
        %v553 = vld [vmem:[%s5 + $0xc] sm:$0xf]
        %v554 = vld [vmem:[%s6] sm:$0x1]
        %v556 = vlaneseq
        %v557 = vshrl.u32 %v556, 7
        %v558 = vsub.s32 0, %v557
        %v559 = vrot.slane %v554, %v558
        %v565 = vunpack.c.l.b16 %v550
        %v566 = vunpack.c.l.b16 %v551
        %v567 = vunpack.c.l.b16 %v552
        %v568 = vunpack.c.l.b16 %v553
        %v569 = vpack.c.b16 %v566, %v565
        %v570 = vpack.c.b16 %v568, %v567
        %vm573 = vcmask 261120
        %v575 = vsel %vm573, %v547, 0
        %577 = vmatprep.subr.bf16.mxu0 0
        %578 = vmatpush1.bf16.msra.mxu0 %v569
        %579 = vmatprep.subr.bf16.mxu0 0
        %580 = vmatpush1.bf16.msra.mxu0 %v570
        %581 = vmatprep.subr.bf16.mxu0 0
        %582 = vmatpush1.bf16.msra.mxu0 0
        %583 = vmatprep.subr.bf16.mxu0 0
        %584 = vmatpush1.bf16.msra.mxu0 0
        %585 = vmatprep.subr.bf16.mxu0 0
        %586 = vmatpush1.bf16.msra.mxu0 0
        %587 = vmatprep.subr.bf16.mxu0 0
        %588 = vmatpush1.bf16.msra.mxu0 0
        %589 = vmatprep.subr.bf16.mxu0 0
        %590 = vmatpush1.bf16.msra.mxu0 0
        %591 = vmatprep.subr.bf16.mxu0 0
        %592 = vmatpush1.bf16.msra.mxu0 0
        %593 = vmatprep.subr.bf16.mxu0 0
        %594 = vmatpush1.bf16.msra.mxu0 0
        %595 = vmatprep.subr.bf16.mxu0 0
        %596 = vmatpush1.bf16.msra.mxu0 0
        %597 = vmatprep.subr.bf16.mxu0 0
        %598 = vmatpush1.bf16.msra.mxu0 0
        %599 = vmatprep.subr.bf16.mxu0 0
        %600 = vmatpush1.bf16.msra.mxu0 0
        %601 = vmatprep.subr.bf16.mxu0 0
        %602 = vmatpush1.bf16.msra.mxu0 0
        %603 = vmatprep.subr.bf16.mxu0 0
        %604 = vmatpush1.bf16.msra.mxu0 0
        %605 = vmatprep.subr.bf16.mxu0 0
        %606 = vmatpush1.bf16.msra.mxu0 0
        %607 = vmatprep.subr.bf16.mxu0 0
        %608 = vmatpush1.bf16.msra.mxu0 0
        %609 = vmatprep.mubr.bf16.mxu0 0
        %610 = vmatmul.mubr.bf16.gmra.mrb[0].mxu0 %v575
        %v611 = vpop.f32.mrb[0].mxu0
        %v612 = vadd.f32 %v559, %v611
        %v613 = vpop.f32.mrb[0].mxu0
        %v614 = vpop.f32.mrb[0].mxu0
        %v615 = vpop.f32.mrb[0].mxu0
        %616 = vdwg.mxu0
        %v617 = vld [vmem:[#allocation14] sm:$0xf]
        %v618 = vld [vmem:[#allocation14 + $0x4] sm:$0xf]
        %v619 = vld [vmem:[#allocation14 + $0x8] sm:$0xf]
        %v620 = vld [vmem:[#allocation14 + $0xc] sm:$0xf]
        %v621 = vld [vmem:[%s8] sm:$0x1]
        %v623 = vlaneseq
        %v624 = vshrl.u32 %v623, 7
        %v625 = vsub.s32 0, %v624
        %v626 = vrot.slane %v621, %v625
        %v632 = vunpack.c.l.b16 %v617
        %v633 = vunpack.c.l.b16 %v618
        %v634 = vunpack.c.l.b16 %v619
        %v635 = vunpack.c.l.b16 %v620
        %v636 = vpack.c.b16 %v633, %v632
        %v637 = vpack.c.b16 %v635, %v634
        %v641 = vsel %vm573, %v549, 0
        %643 = vmatprep.subr.bf16.mxu0 0
        %644 = vmatpush1.bf16.msra.mxu0 %v636
        %645 = vmatprep.subr.bf16.mxu0 0
        %646 = vmatpush1.bf16.msra.mxu0 %v637
        %647 = vmatprep.subr.bf16.mxu0 0
        %648 = vmatpush1.bf16.msra.mxu0 0
        %649 = vmatprep.subr.bf16.mxu0 0
        %650 = vmatpush1.bf16.msra.mxu0 0
        %651 = vmatprep.subr.bf16.mxu0 0
        %652 = vmatpush1.bf16.msra.mxu0 0
        %653 = vmatprep.subr.bf16.mxu0 0
        %654 = vmatpush1.bf16.msra.mxu0 0
        %655 = vmatprep.subr.bf16.mxu0 0
        %656 = vmatpush1.bf16.msra.mxu0 0
        %657 = vmatprep.subr.bf16.mxu0 0
        %658 = vmatpush1.bf16.msra.mxu0 0
        %659 = vmatprep.subr.bf16.mxu0 0
        %660 = vmatpush1.bf16.msra.mxu0 0
        %661 = vmatprep.subr.bf16.mxu0 0
        %662 = vmatpush1.bf16.msra.mxu0 0
        %663 = vmatprep.subr.bf16.mxu0 0
        %664 = vmatpush1.bf16.msra.mxu0 0
        %665 = vmatprep.subr.bf16.mxu0 0
        %666 = vmatpush1.bf16.msra.mxu0 0
        %667 = vmatprep.subr.bf16.mxu0 0
        %668 = vmatpush1.bf16.msra.mxu0 0
        %669 = vmatprep.subr.bf16.mxu0 0
        %670 = vmatpush1.bf16.msra.mxu0 0
        %671 = vmatprep.subr.bf16.mxu0 0
        %672 = vmatpush1.bf16.msra.mxu0 0
        %673 = vmatprep.subr.bf16.mxu0 0
        %674 = vmatpush1.bf16.msra.mxu0 0
        %675 = vmatprep.mubr.bf16.mxu0 0
        %676 = vmatmul.mubr.bf16.gmra.mrb[0].mxu0 %v641
        %v677 = vpop.f32.mrb[0].mxu0
        %v678 = vadd.f32 %v626, %v677
        %v679 = vpop.f32.mrb[0].mxu0
        %v680 = vpop.f32.mrb[0].mxu0
        %v681 = vpop.f32.mrb[0].mxu0
        %682 = vdwg.mxu0
        %v683 = vpack.c.bf16 %v612, %v612
        %v684 = vpack.c.bf16 %v678, %v678
        %v685 = vld [vmem:[#allocation2] sm:$0xf]
        %686 = vmatprep.subr.bf16.mxu0 0
        %687 = vmatpush1.bf16.xpose.msra.mxu0 %v683
        %688 = vmatprep.subr.bf16.mxu0 0
        %689 = vmatpush1.bf16.xpose.msra.mxu0 0
        %690 = vmatprep.subr.bf16.mxu0 0
        %691 = vmatpush1.bf16.xpose.msra.mxu0 0
        %692 = vmatprep.subr.bf16.mxu0 0
        %693 = vmatpush1.bf16.xpose.msra.mxu0 0
        %694 = vmatprep.subr.bf16.mxu0 0
        %695 = vmatpush1.bf16.xpose.msra.mxu0 0
        %696 = vmatprep.subr.bf16.mxu0 0
        %697 = vmatpush1.bf16.xpose.msra.mxu0 0
        %698 = vmatprep.subr.bf16.mxu0 0
        %699 = vmatpush1.bf16.xpose.msra.mxu0 0
        %700 = vmatprep.subr.bf16.mxu0 0
        %701 = vmatpush1.bf16.xpose.msra.mxu0 0
        %702 = vmatprep.subr.bf16.mxu0 0
        %703 = vmatpush1.bf16.xpose.msra.mxu0 0
        %704 = vmatprep.subr.bf16.mxu0 0
        %705 = vmatpush1.bf16.xpose.msra.mxu0 0
        %706 = vmatprep.subr.bf16.mxu0 0
        %707 = vmatpush1.bf16.xpose.msra.mxu0 0
        %708 = vmatprep.subr.bf16.mxu0 0
        %709 = vmatpush1.bf16.xpose.msra.mxu0 0
        %710 = vmatprep.subr.bf16.mxu0 0
        %711 = vmatpush1.bf16.xpose.msra.mxu0 0
        %712 = vmatprep.subr.bf16.mxu0 0
        %713 = vmatpush1.bf16.xpose.msra.mxu0 0
        %714 = vmatprep.subr.bf16.mxu0 0
        %715 = vmatpush1.bf16.xpose.msra.mxu0 0
        %716 = vmatprep.subr.bf16.mxu0 0
        %717 = vmatpush1.bf16.xpose.msra.mxu0 0
        %718 = vmatprep.mubr.bf16.mxu0 0
        %719 = vmatmul.mubr.bf16.gmra.mrb[0].mxu0 %v685
        %v720 = vpop.f32.mrb[0].mxu0
        %v721 = vadd.f32 0.0, %v720
        %v722 = vpop.f32.mrb[0].mxu0
        %v723 = vpop.f32.mrb[0].mxu0
        %v724 = vpop.f32.mrb[0].mxu0
        %725 = vdwg.mxu0
        %v726 = vld [vmem:[#allocation3] sm:$0xff]
        %vm727 = vcmask 64512
        %v728 = vsel %vm727, %v721, -inf
        %729 = vmax.xlane.f32.xlu0 %v728
        %v730 = vpop.xlane.xlu0 %729
        %v731 = vmax.f32 %v726, %v730
        %v732 = vsub.f32 %v726, %v731
        %v733 = vmul.f32 %v732, 1.442695
        %v734 = vpow.pop %v733
        %736 = vset.pattern.permute.xlu0 0
        %737 = vperm.xlu0 %736, %v731
        %v738 = vpop.permute.xlu0 %737
        %v740 = vsub.f32 %v721, %v738
        %v741 = vmul.f32 %v740, 1.442695
        %v742 = vpow.pop %v741
        %v743 = vld [vmem:[#allocation4] sm:$0xff]
        %v744 = vmul.f32 %v734, %v743
        %v745 = vsel %vm727, %v742, 0.0
        %746 = vadd.xlane.f32.xlu0 %v745
        %v747 = vpop.xlane.xlu0 %746
        %v748 = vadd.f32 %v744, %v747
        %vm749 = vcmask 7168
        %750 = vst.msk [vmem:[#allocation4] sm:$0xff] %vm749, %v748
        %v751 = vld [vmem:[#allocation5] sm:$0xff]
        %753 = vset.pattern.permute.xlu0 0
        %754 = vperm.xlu0 %753, %v734
        %v755 = vpop.permute.xlu0 %754
        %v757 = vmul.f32 %v755, %v751
        %v758 = vpack.c.bf16 %v742, %v742
        %v760 = vsel %vm727, %v758, 0
        %vm762 = vcmask 1043456
        %v764 = vsel %vm762, %v684, 0
        %766 = vmatprep.subr.bf16.mxu0 0
        %767 = vmatpush1.bf16.msra.mxu0 %v764
        %768 = vmatprep.subr.bf16.mxu0 0
        %769 = vmatpush1.bf16.msra.mxu0 0
        %770 = vmatprep.subr.bf16.mxu0 0
        %771 = vmatpush1.bf16.msra.mxu0 0
        %772 = vmatprep.subr.bf16.mxu0 0
        %773 = vmatpush1.bf16.msra.mxu0 0
        %774 = vmatprep.subr.bf16.mxu0 0
        %775 = vmatpush1.bf16.msra.mxu0 0
        %776 = vmatprep.subr.bf16.mxu0 0
        %777 = vmatpush1.bf16.msra.mxu0 0
        %778 = vmatprep.subr.bf16.mxu0 0
        %779 = vmatpush1.bf16.msra.mxu0 0
        %780 = vmatprep.subr.bf16.mxu0 0
        %781 = vmatpush1.bf16.msra.mxu0 0
        %782 = vmatprep.subr.bf16.mxu0 0
        %783 = vmatpush1.bf16.msra.mxu0 0
        %784 = vmatprep.subr.bf16.mxu0 0
        %785 = vmatpush1.bf16.msra.mxu0 0
        %786 = vmatprep.subr.bf16.mxu0 0
        %787 = vmatpush1.bf16.msra.mxu0 0
        %788 = vmatprep.subr.bf16.mxu0 0
        %789 = vmatpush1.bf16.msra.mxu0 0
        %790 = vmatprep.subr.bf16.mxu0 0
        %791 = vmatpush1.bf16.msra.mxu0 0
        %792 = vmatprep.subr.bf16.mxu0 0
        %793 = vmatpush1.bf16.msra.mxu0 0
        %794 = vmatprep.subr.bf16.mxu0 0
        %795 = vmatpush1.bf16.msra.mxu0 0
        %796 = vmatprep.subr.bf16.mxu0 0
        %797 = vmatpush1.bf16.msra.mxu0 0
        %798 = vmatprep.mubr.bf16.mxu0 0
        %799 = vmatmul.mubr.bf16.gmra.mrb[0].mxu0 %v760
        %v800 = vpop.f32.mrb[0].mxu0
        %v801 = vadd.f32 0.0, %v800
        %v802 = vpop.f32.mrb[0].mxu0
        %v803 = vpop.f32.mrb[0].mxu0
        %v804 = vpop.f32.mrb[0].mxu0
        %805 = vdwg.mxu0
        %v806 = vadd.f32 %v757, %v801
        %807 = vst [vmem:[#allocation5] sm:$0xff] %v806
        %808 = vst.msk [vmem:[#allocation3] sm:$0xff] %vm749, %v731
        // Predicated region
        $region81: #{tpu_custom_call.1} parent=55 // pred_check
          %p809 = pneg %p467
        $region82: #{tpu_custom_call.1} parent=55 // pred_check_branch
          %811 = sbr.rel (%p809) target = $region84
        $region83: #{tpu_custom_call.1} parent=55 // pred_region
          %v812 = vld [vmem:[#allocation5] sm:$0xff]
          %v813 = vld [vmem:[#allocation4] sm:$0xff]
          %v814 = vrcp.pop %v813
          %816 = vset.pattern.permute.xlu0 0
          %817 = vperm.xlu0 %816, %v814
          %v818 = vpop.permute.xlu0 %817
          %v820 = vmul.f32 %v812, %v818
          %vm821 = vcmask 130048
          %822 = vst.msk [vmem:[%s465] sm:$0xff] %vm821, %v820
        $region84: #{tpu_custom_call.1} parent=55 // pred_fallthru
          _
        %s823 = sand.u32 %s258, 1
        %s824 = scalar_lea.sflag [#allocation8], %s823
        %s825 = sand.u32 %s258, 1
        %s826 = smul.addr %s825, 8
        %s827 = scalar_lea.vmem [#allocation15], %s826
        // Predicated region
        $region85: #{tpu_custom_call.1} parent=55 // pred_check
          %p828 = pneg %p268
        $region86: #{tpu_custom_call.1} parent=55 // pred_check_branch
          %830 = sbr.rel (%p828) target = $region88
        $region87: #{tpu_custom_call.1} parent=55 // pred_region
          %s832 = ssub.s32 128, 128
          %833 = vsyncadd %s824, %s832
          %s834 = smul.addr %s34, 128
          %s835 = scalar_lea.hbm %s9, %s834
          %s837 = sshll.u32 %s827, 4
          %s838 = int_to_ptr.vmem [resolvable:$true] %s837
          %840 = dma.vmem_to_hbm [thread:$0]  %s838, 128, %s835, %s824
        $region88: #{tpu_custom_call.1} parent=55 // pred_fallthru
          _
      $region56: #{tpu_custom_call.1} parent=5 // pred_fallthru
        _
      %p841 = scmp.le.s32.totalorder 2, %s25
      // Predicated region
      $region89: #{tpu_custom_call.1} parent=5 // pred_check
        %p842 = pneg %p841
      $region90: #{tpu_custom_call.1} parent=5 // pred_check_branch
        %844 = sbr.rel (%p842) target = $region92
      $region91: #{tpu_custom_call.1} parent=5 // pred_region
        %s845 = ssub.s32 %s25, 2
        // Predicated region
        $region93: #{tpu_custom_call.1} parent=91 // pred_check
          %p846 = pneg %p274
        $region94: #{tpu_custom_call.1} parent=91 // pred_check_branch
          %848 = sbr.rel (%p846) target = $region96
        $region95: #{tpu_custom_call.1} parent=91 // pred_region
          %s849 = sand.u32 %s259, 1
          %s850 = scalar_lea.sflag [#allocation8], %s849
          %s851 = sand.u32 %s259, 1
          %s852 = smul.addr %s851, 8
          %s853 = scalar_lea.vmem [#allocation15], %s852
          %854 = dma.done %s850, 128
        $region96: #{tpu_custom_call.1} parent=91 // pred_fallthru
          _
      $region92: #{tpu_custom_call.1} parent=5 // pred_fallthru
        _
    $region6: #{tpu_custom_call.1} parent=1 // loop_footer
      %s29 = sadd.s32 1, %s25
    $region7: #{tpu_custom_call.1} parent=1 // loop_footer_branch
      %24 = sbr.rel target = $region3
    $region8: #{tpu_custom_call.1} parent=1 // loop_exit
      _
    %855 = vsyncpa [#allocation7], 1
    %s856 = scalar_lea.sflag [#allocation7], 1
    %857 = vsyncpa %s856, 1
    %858 = vsyncpa [#allocation10], 1
    %s859 = scalar_lea.sflag [#allocation10], 1
    %860 = vsyncpa %s859, 1
    %861 = vsyncpa [#allocation13], 1
    %862 = vsyncpa [#allocation8], 1
    %s863 = scalar_lea.sflag [#allocation8], 1
    %864 = vsyncpa %s863, 1

</llo_original>
